<compile_context>
chip_gen: v7x
topology: tpu7x:2x2x1
jax: 0.10.0
libtpu: 0.0.40
codegen_flags: <defaults>
</compile_context>

<pallas_src>
import jax
import jax.numpy as jnp
from jax.experimental import pallas as pl
from jax.experimental.pallas import tpu as pltpu

HIDDEN = 128
SUBLANE = 8


def _round_up(n, m):
    return ((n + m - 1) // m) * m


def _mlp_kernel(x_ref, w1_ref, b1_ref, w2_ref, b2_ref, w3_ref, b3_ref, o_ref):
    # One batch tile per grid step; three MXU matmuls (bf16 in, f32 accumulate),
    # bias-add + ReLU on the VPU.
    x = x_ref[...].astype(w1_ref.dtype)  # (TB, in_dim) f32 -> bf16 in-kernel

    h = jnp.dot(x, w1_ref[...], preferred_element_type=jnp.float32) + b1_ref[...]
    h = jnp.maximum(h, 0.0)

    h = jnp.dot(h.astype(w2_ref.dtype), w2_ref[...],
                preferred_element_type=jnp.float32) + b2_ref[...]
    h = jnp.maximum(h, 0.0)

    h = jnp.dot(h.astype(w3_ref.dtype), w3_ref[...],
                preferred_element_type=jnp.float32) + b3_ref[...]
    h = jnp.maximum(h, 0.0)

    o_ref[...] = h.astype(o_ref.dtype)


def map_action_predict_pallas(x, params, *, block_b=1024):
    """Forward pass of map_action_predict.

    x: (B, input_dim) float32
    params: dict with w1 (input_dim,128), b1 (1,128), w2 (128,128), b2 (1,128),
            w3 (128,output_dim), b3 (1,output_dim)  -- weights stored (in,out).
    returns: (B, output_dim) float32
    """
    B, in_dim = x.shape
    out_dim = params["w3"].shape[1]

    # Batch tiling: TB rows per grid step (multiple of 8 sublanes); pad B so the
    # grid divides evenly. Padding is skipped when already aligned.
    tb = min(_round_up(block_b, SUBLANE), _round_up(B, SUBLANE))
    b_pad = _round_up(B, tb)

    x_p = x.astype(jnp.float32)
    if b_pad != B:
        x_p = jnp.pad(x_p, ((0, b_pad - B), (0, 0)))

    # bf16 weights (MXU-native, half the resident bytes); f32 biases.
    w1 = params["w1"].astype(jnp.bfloat16)
    w2 = params["w2"].astype(jnp.bfloat16)
    w3 = params["w3"].astype(jnp.bfloat16)
    b1 = params["b1"].astype(jnp.float32)
    b2 = params["b2"].astype(jnp.float32)
    b3 = params["b3"].astype(jnp.float32)

    grid = (b_pad // tb,)

    def resident(arr):
        # Whole array as one block, constant index -> stays resident in VMEM.
        return pl.BlockSpec(arr.shape, lambda i: (0, 0))

    in_specs = [
        pl.BlockSpec((tb, in_dim), lambda i: (i, 0)),   # x: tiled over batch
        resident(w1), resident(b1),
        resident(w2), resident(b2),
        resident(w3), resident(b3),
    ]
    out_specs = pl.BlockSpec((tb, out_dim), lambda i: (i, 0))

    # VMEM plan: double-buffered x + out tiles, resident weights, f32
    # intermediates (compiler scratch).
    vmem_bytes = (
        2 * tb * in_dim * 4            # x tiles (f32, double-buffered)
        + 2 * tb * out_dim * 4         # out tiles (f32, double-buffered)
        + 2 * tb * HIDDEN * 4          # h1/h2 intermediates (f32)
        + 2 * (w1.size + w2.size + w3.size) * 2
        + 2 * (b1.size + b2.size + b3.size) * 4
    )
    # Generous headroom, but stay well under v7x's 64 MiB physical VMEM.
    vmem_limit = int(min(max(4 * vmem_bytes, 16 * 1024 * 1024), 48 * 1024 * 1024))

    flops = 2 * b_pad * (in_dim * HIDDEN + HIDDEN * HIDDEN + HIDDEN * out_dim)
    bytes_accessed = (
        b_pad * in_dim * 4 + b_pad * out_dim * 4
        + (w1.size + w2.size + w3.size) * 2
        + (b1.size + b2.size + b3.size) * 4
    )

    out = pl.pallas_call(
        _mlp_kernel,
        out_shape=jax.ShapeDtypeStruct((b_pad, out_dim), jnp.float32),
        grid=grid,
        in_specs=in_specs,
        out_specs=out_specs,
        compiler_params=pltpu.CompilerParams(
            dimension_semantics=("parallel",),
            vmem_limit_bytes=vmem_limit,
        ),
        cost_estimate=pl.CostEstimate(
            flops=flops, transcendentals=0, bytes_accessed=bytes_accessed),
    )(x_p, w1, b1, w2, b2, w3, b3)

    return out[:B] if b_pad != B else out


def init_params(key, input_dim, output_dim):
    """Deterministic synthetic parameters matching the module's shapes."""
    k1, k2, k3, k4, k5, k6 = jax.random.split(key, 6)
    scale1 = 1.0 / jnp.sqrt(input_dim)
    scale2 = 1.0 / jnp.sqrt(128.0)
    return {
        # stored as (in, out) == transpose of PyTorch's (out, in)
        "w1": jax.random.uniform(k1, (input_dim, 128), jnp.float32, -scale1, scale1),
        "b1": jax.random.uniform(k2, (1, 128), jnp.float32, -scale1, scale1),
        "w2": jax.random.uniform(k3, (128, 128), jnp.float32, -scale2, scale2),
        "b2": jax.random.uniform(k4, (1, 128), jnp.float32, -scale2, scale2),
        "w3": jax.random.uniform(k5, (128, output_dim), jnp.float32, -scale2, scale2),
        "b3": jax.random.uniform(k6, (1, output_dim), jnp.float32, -scale2, scale2),
    }


def reference_forward(x, params):
    """Pure-JAX f32 reference for correctness checks."""
    h = jnp.maximum(x @ params["w1"] + params["b1"], 0.0)
    h = jnp.maximum(h @ params["w2"] + params["b2"], 0.0)
    h = jnp.maximum(h @ params["w3"] + params["b3"], 0.0)
    return h


if __name__ == "__main__":
    key = jax.random.PRNGKey(0)
    k_params, k_x1, k_x2 = jax.random.split(key, 3)

    input_dim = 32
    output_dim = 16
    params = init_params(k_params, input_dim, output_dim)

    # Small demo batch (single grid step, no batch padding).
    batch = 8
    x = jax.random.normal(k_x1, (batch, input_dim), dtype=jnp.float32)
    out = jax.block_until_ready(map_action_predict_pallas(x, params))
    ref = reference_forward(x, params)
    assert out.shape == (batch, output_dim)
    # bf16 weights/activations with f32 accumulation -> ~1e-2 tolerance.
    assert jnp.allclose(out, ref, atol=2e-2, rtol=2e-2), "small-batch mismatch"

    # Ragged batch to exercise batch tiling + padding (grid of 3 steps).
    batch2 = 300
    x2 = jax.random.normal(k_x2, (batch2, input_dim), dtype=jnp.float32)
    out2 = jax.block_until_ready(map_action_predict_pallas(x2, params, block_b=128))
    ref2 = reference_forward(x2, params)
    assert out2.shape == (batch2, output_dim)
    assert jnp.allclose(out2, ref2, atol=2e-2, rtol=2e-2), "tiled-batch mismatch"

    print("KERNEL_OK")
</pallas_src>

<mosaic_0001>
module attributes {stable_mosaic.version = 11 : i64} {
  func.func @_mlp_kernel(%arg0: i32, %arg1: memref<8x32xf32, #tpu.memory_space<vmem>>, %arg2: memref<32x128xbf16, #tpu.memory_space<vmem>>, %arg3: memref<1x128xf32, #tpu.memory_space<vmem>>, %arg4: memref<128x128xbf16, #tpu.memory_space<vmem>>, %arg5: memref<1x128xf32, #tpu.memory_space<vmem>>, %arg6: memref<128x16xbf16, #tpu.memory_space<vmem>>, %arg7: memref<1x16xf32, #tpu.memory_space<vmem>>, %arg8: memref<8x16xf32, #tpu.memory_space<vmem>>) attributes {dimension_semantics = [#tpu.dimension_semantics<parallel>], iteration_bounds = array<i64: 1>, scalar_prefetch = 0 : i64, scratch_operands = 0 : i64, tpu.core_type = #tpu.core_type<tc>, window_params = [{transform_indices = @transform_0, window_bounds = array<i64: 8, 32>}, {pipeline_mode = #tpu.pipeline_mode<synchronous>, transform_indices = @transform_1, window_bounds = array<i64: 32, 128>}, {pipeline_mode = #tpu.pipeline_mode<synchronous>, transform_indices = @transform_2, window_bounds = array<i64: 1, 128>}, {pipeline_mode = #tpu.pipeline_mode<synchronous>, transform_indices = @transform_3, window_bounds = array<i64: 128, 128>}, {pipeline_mode = #tpu.pipeline_mode<synchronous>, transform_indices = @transform_4, window_bounds = array<i64: 1, 128>}, {pipeline_mode = #tpu.pipeline_mode<synchronous>, transform_indices = @transform_5, window_bounds = array<i64: 128, 16>}, {pipeline_mode = #tpu.pipeline_mode<synchronous>, transform_indices = @transform_6, window_bounds = array<i64: 1, 16>}, {transform_indices = @transform_7, window_bounds = array<i64: 8, 16>}]} {
    %c0 = arith.constant 0 : index
    %c0_0 = arith.constant 0 : index
    %0 = vector.load %arg1[%c0, %c0_0] : memref<8x32xf32, #tpu.memory_space<vmem>>, vector<8x32xf32>
    %1 = arith.truncf %0 : vector<8x32xf32> to vector<8x32xbf16>
    %c0_1 = arith.constant 0 : index
    %c0_2 = arith.constant 0 : index
    %2 = vector.load %arg2[%c0_1, %c0_2] : memref<32x128xbf16, #tpu.memory_space<vmem>>, vector<32x128xbf16>
    %cst = arith.constant dense<0.000000e+00> : vector<8x128xf32>
    %3 = tpu.matmul %1, %2, %cst {dimension_numbers = #tpu.dot_dimension_numbers<[1], [0], [0], [1], [0, 0, 1, 1], [], []>} : vector<8x32xbf16>, vector<32x128xbf16>, vector<8x128xf32> -> vector<8x128xf32>
    %c0_3 = arith.constant 0 : index
    %c0_4 = arith.constant 0 : index
    %4 = vector.load %arg3[%c0_3, %c0_4] : memref<1x128xf32, #tpu.memory_space<vmem>>, vector<1x128xf32>
    %5 = vector.broadcast %4 : vector<1x128xf32> to vector<8x128xf32>
    %6 = arith.addf %3, %5 : vector<8x128xf32>
    %cst_5 = arith.constant 0.000000e+00 : f32
    %7 = vector.broadcast %cst_5 : f32 to vector<8x128xf32>
    %8 = arith.maximumf %6, %7 : vector<8x128xf32>
    %9 = arith.truncf %8 : vector<8x128xf32> to vector<8x128xbf16>
    %c0_6 = arith.constant 0 : index
    %c0_7 = arith.constant 0 : index
    %10 = vector.load %arg4[%c0_6, %c0_7] : memref<128x128xbf16, #tpu.memory_space<vmem>>, vector<128x128xbf16>
    %cst_8 = arith.constant dense<0.000000e+00> : vector<8x128xf32>
    %11 = tpu.matmul %9, %10, %cst_8 {dimension_numbers = #tpu.dot_dimension_numbers<[1], [0], [0], [1], [0, 0, 1, 1], [], []>} : vector<8x128xbf16>, vector<128x128xbf16>, vector<8x128xf32> -> vector<8x128xf32>
    %c0_9 = arith.constant 0 : index
    %c0_10 = arith.constant 0 : index
    %12 = vector.load %arg5[%c0_9, %c0_10] : memref<1x128xf32, #tpu.memory_space<vmem>>, vector<1x128xf32>
    %13 = vector.broadcast %12 : vector<1x128xf32> to vector<8x128xf32>
    %14 = arith.addf %11, %13 : vector<8x128xf32>
    %cst_11 = arith.constant 0.000000e+00 : f32
    %15 = vector.broadcast %cst_11 : f32 to vector<8x128xf32>
    %16 = arith.maximumf %14, %15 : vector<8x128xf32>
    %17 = arith.truncf %16 : vector<8x128xf32> to vector<8x128xbf16>
    %c0_12 = arith.constant 0 : index
    %c0_13 = arith.constant 0 : index
    %18 = vector.load %arg6[%c0_12, %c0_13] : memref<128x16xbf16, #tpu.memory_space<vmem>>, vector<128x16xbf16>
    %cst_14 = arith.constant dense<0.000000e+00> : vector<8x16xf32>
    %19 = tpu.matmul %17, %18, %cst_14 {dimension_numbers = #tpu.dot_dimension_numbers<[1], [0], [0], [1], [0, 0, 1, 1], [], []>} : vector<8x128xbf16>, vector<128x16xbf16>, vector<8x16xf32> -> vector<8x16xf32>
    %c0_15 = arith.constant 0 : index
    %c0_16 = arith.constant 0 : index
    %20 = vector.load %arg7[%c0_15, %c0_16] : memref<1x16xf32, #tpu.memory_space<vmem>>, vector<1x16xf32>
    %21 = vector.broadcast %20 : vector<1x16xf32> to vector<8x16xf32>
    %22 = arith.addf %19, %21 : vector<8x16xf32>
    %cst_17 = arith.constant 0.000000e+00 : f32
    %23 = vector.broadcast %cst_17 : f32 to vector<8x16xf32>
    %24 = arith.maximumf %22, %23 : vector<8x16xf32>
    %c0_18 = arith.constant 0 : index
    %c0_19 = arith.constant 0 : index
    %25 = vector.load %arg8[%c0_18, %c0_19] : memref<8x16xf32, #tpu.memory_space<vmem>>, vector<8x16xf32>
    tpu.vector_store %arg8[%c0_18, %c0_19], %24 {strides = array<i32>} : memref<8x16xf32, #tpu.memory_space<vmem>>, vector<8x16xf32>,
    return
  }
  func.func @transform_0(%arg0: i32) -> (i32, i32) {
    %c0_i32 = arith.constant 0 : i32
    %c0_i32_0 = arith.constant 0 : i32
    return %arg0, %c0_i32 : i32, i32
  }
  func.func @transform_1(%arg0: i32) -> (i32, i32) {
    %c0_i32 = arith.constant 0 : i32
    %c0_i32_0 = arith.constant 0 : i32
    %c0_i32_1 = arith.constant 0 : i32
    return %c0_i32, %c0_i32_0 : i32, i32
  }
  func.func @transform_2(%arg0: i32) -> (i32, i32) {
    %c0_i32 = arith.constant 0 : i32
    %c0_i32_0 = arith.constant 0 : i32
    %c0_i32_1 = arith.constant 0 : i32
    return %c0_i32, %c0_i32_0 : i32, i32
  }
  func.func @transform_3(%arg0: i32) -> (i32, i32) {
    %c0_i32 = arith.constant 0 : i32
    %c0_i32_0 = arith.constant 0 : i32
    %c0_i32_1 = arith.constant 0 : i32
    return %c0_i32, %c0_i32_0 : i32, i32
  }
  func.func @transform_4(%arg0: i32) -> (i32, i32) {
    %c0_i32 = arith.constant 0 : i32
    %c0_i32_0 = arith.constant 0 : i32
    %c0_i32_1 = arith.constant 0 : i32
    return %c0_i32, %c0_i32_0 : i32, i32
  }
  func.func @transform_5(%arg0: i32) -> (i32, i32) {
    %c0_i32 = arith.constant 0 : i32
    %c0_i32_0 = arith.constant 0 : i32
    %c0_i32_1 = arith.constant 0 : i32
    return %c0_i32, %c0_i32_0 : i32, i32
  }
  func.func @transform_6(%arg0: i32) -> (i32, i32) {
    %c0_i32 = arith.constant 0 : i32
    %c0_i32_0 = arith.constant 0 : i32
    %c0_i32_1 = arith.constant 0 : i32
    return %c0_i32, %c0_i32_0 : i32, i32
  }
  func.func @transform_7(%arg0: i32) -> (i32, i32) {
    %c0_i32 = arith.constant 0 : i32
    %c0_i32_0 = arith.constant 0 : i32
    return %arg0, %c0_i32 : i32, i32
  }
}

</mosaic_0001>

<llo_original>
// kernel: tpu_custom_call.1
$region0: #{tpu_custom_call.1}
  #allocation0 [shape = 'u32[]', space=smem, size = 0x4, offset = 0x4, fixed_abs, tag = 'smem constant byte address 0x4 - core index']
  #allocation1 [shape = 'u32[144,128]{1,0:T(1,128)}', space=vmem, size = 0x12000, scoped, tag = 'internal scratch']
  %s0 = inlined_call_operand.hbm [shape: f32[8,32], index: 0, kind: input, shape index: {}]
  %s1 = inlined_call_operand.vmem [shape: bf16[32,128], index: 1, kind: input, shape index: {}]
  %s2 = inlined_call_operand.vmem [shape: f32[1,128], index: 2, kind: input, shape index: {}]
  %s3 = inlined_call_operand.vmem [shape: bf16[128,128], index: 3, kind: input, shape index: {}]
  %s4 = inlined_call_operand.vmem [shape: f32[1,128], index: 4, kind: input, shape index: {}]
  %s5 = inlined_call_operand.vmem [shape: bf16[128,16], index: 5, kind: input, shape index: {}]
  %s6 = inlined_call_operand.vmem [shape: f32[1,16], index: 6, kind: input, shape index: {}]
  %s7 = inlined_call_operand.hbm [shape: f32[8,16], index: 7, kind: output, shape index: {}]
  %s8 = sld [smem:[#allocation0]]
  $region42: #{tpu_custom_call.1} parent=0
    _
  %s10 = ssub.s32 1, %s8
  %s11 = scalar_select 0, %s10, %s8
  $region1: #{tpu_custom_call.1} parent=0
    #allocation2 [shape = 'u8[4096]{0}', space=vmem, size = 0x1000, scoped, tag = 'input window, operand 0, single buffered']
    #allocation3 [shape = 's32[1]{0}', space=sflag, size = 0x4, scoped, tag = 'scoped memory for tpu_custom_call.1']
    #allocation4 [shape = 's32[1]{0}', space=sflag, size = 0x4, scoped, tag = 'scoped memory for tpu_custom_call.1']
    #allocation5 [shape = 'u8[4096]{0}', space=vmem, size = 0x1000, scoped, tag = 'output window, operand 0, single buffered']
    %12 = vsyncpa [#allocation3], 0
    %13 = vsyncpa [#allocation4], 0
    // Predicated region
    $region2: #{tpu_custom_call.1} parent=1 // pred_check
      _
    $region3: #{tpu_custom_call.1} parent=1 // pred_check_branch
      %15 = sbr.rel (0) target = $region5
    $region4: #{tpu_custom_call.1} parent=1 // pred_region
      %s17 = ssub.s32 128, 128
      %18 = vsyncadd [#allocation3], %s17
      %s20 = sshll.u32 [#allocation2], 4
      %s21 = int_to_ptr.vmem [resolvable:$true] %s20
      %23 = dma.hbm_to_vmem [thread:$0]  %s0, 128, %s21, [#allocation3]
    $region5: #{tpu_custom_call.1} parent=1 // pred_fallthru
      _
    // Predicated region
    $region6: #{tpu_custom_call.1} parent=1 // pred_check
      _
    $region7: #{tpu_custom_call.1} parent=1 // pred_check_branch
      %25 = sbr.rel (0) target = $region9
    $region8: #{tpu_custom_call.1} parent=1 // pred_region
      _
    $region9: #{tpu_custom_call.1} parent=1 // pred_fallthru
      _
    // Predicated region
    $region10: #{tpu_custom_call.1} parent=1 // pred_check
      _
    $region11: #{tpu_custom_call.1} parent=1 // pred_check_branch
      %27 = sbr.rel (0) target = $region13
    $region12: #{tpu_custom_call.1} parent=1 // pred_region
      _
    $region13: #{tpu_custom_call.1} parent=1 // pred_fallthru
      _
    // Predicated region
    $region14: #{tpu_custom_call.1} parent=1 // pred_check
      _
    $region15: #{tpu_custom_call.1} parent=1 // pred_check_branch
      %29 = sbr.rel (0) target = $region17
    $region16: #{tpu_custom_call.1} parent=1 // pred_region
      _
    $region17: #{tpu_custom_call.1} parent=1 // pred_fallthru
      _
    // Predicated region
    $region18: #{tpu_custom_call.1} parent=1 // pred_check
      _
    $region19: #{tpu_custom_call.1} parent=1 // pred_check_branch
      %31 = sbr.rel (0) target = $region21
    $region20: #{tpu_custom_call.1} parent=1 // pred_region
      _
    $region21: #{tpu_custom_call.1} parent=1 // pred_fallthru
      _
    // Predicated region
    $region22: #{tpu_custom_call.1} parent=1 // pred_check
      _
    $region23: #{tpu_custom_call.1} parent=1 // pred_check_branch
      %33 = sbr.rel (0) target = $region25
    $region24: #{tpu_custom_call.1} parent=1 // pred_region
      _
    $region25: #{tpu_custom_call.1} parent=1 // pred_fallthru
      _
    // Predicated region
    $region26: #{tpu_custom_call.1} parent=1 // pred_check
      _
    $region27: #{tpu_custom_call.1} parent=1 // pred_check_branch
      %35 = sbr.rel (0) target = $region29
    $region28: #{tpu_custom_call.1} parent=1 // pred_region
      _
    $region29: #{tpu_custom_call.1} parent=1 // pred_fallthru
      _
    // Predicated region
    $region30: #{tpu_custom_call.1} parent=1 // pred_check
      _
    $region31: #{tpu_custom_call.1} parent=1 // pred_check_branch
      %37 = sbr.rel (0) target = $region33
    $region32: #{tpu_custom_call.1} parent=1 // pred_region
      %38 = dma.done [#allocation3], 128
    $region33: #{tpu_custom_call.1} parent=1 // pred_fallthru
      _
    %v40 = vld [vmem:[#allocation2] sm:$0xff]
    %v41 = vpack.c.bf16 %v40, %v40
    %v42 = vld [vmem:[%s1] sm:$0xf]
    %v43 = vld [vmem:[%s1 + $0x4] sm:$0xf]
    %v44 = vld [vmem:[%s1 + $0x8] sm:$0xf]
    %v45 = vld [vmem:[%s1 + $0xc] sm:$0xf]
    %v46 = vld [vmem:[%s2] sm:$0x1]
    %v48 = vlaneseq
    %v49 = vshrl.u32 %v48, 7
    %v50 = vsub.s32 0, %v49
    %v51 = vrot.slane %v46, %v50
    %v57 = vunpack.c.l.b16 %v42
    %v58 = vunpack.c.l.b16 %v43
    %v59 = vunpack.c.l.b16 %v44
    %v60 = vunpack.c.l.b16 %v45
    %v61 = vpack.c.b16 %v58, %v57
    %v62 = vpack.c.b16 %v60, %v59
    %vm65 = vcmask 261120
    %v67 = vsel %vm65, %v41, 0
    %69 = vmatprep.subr.bf16.mxu0 0
    %70 = vmatpush1.bf16.msra.mxu0 %v61
    %71 = vmatprep.subr.bf16.mxu0 0
    %72 = vmatpush1.bf16.msra.mxu0 %v62
    %73 = vmatprep.subr.bf16.mxu0 0
    %74 = vmatpush1.bf16.msra.mxu0 0
    %75 = vmatprep.subr.bf16.mxu0 0
    %76 = vmatpush1.bf16.msra.mxu0 0
    %77 = vmatprep.subr.bf16.mxu0 0
    %78 = vmatpush1.bf16.msra.mxu0 0
    %79 = vmatprep.subr.bf16.mxu0 0
    %80 = vmatpush1.bf16.msra.mxu0 0
    %81 = vmatprep.subr.bf16.mxu0 0
    %82 = vmatpush1.bf16.msra.mxu0 0
    %83 = vmatprep.subr.bf16.mxu0 0
    %84 = vmatpush1.bf16.msra.mxu0 0
    %85 = vmatprep.subr.bf16.mxu0 0
    %86 = vmatpush1.bf16.msra.mxu0 0
    %87 = vmatprep.subr.bf16.mxu0 0
    %88 = vmatpush1.bf16.msra.mxu0 0
    %89 = vmatprep.subr.bf16.mxu0 0
    %90 = vmatpush1.bf16.msra.mxu0 0
    %91 = vmatprep.subr.bf16.mxu0 0
    %92 = vmatpush1.bf16.msra.mxu0 0
    %93 = vmatprep.subr.bf16.mxu0 0
    %94 = vmatpush1.bf16.msra.mxu0 0
    %95 = vmatprep.subr.bf16.mxu0 0
    %96 = vmatpush1.bf16.msra.mxu0 0
    %97 = vmatprep.subr.bf16.mxu0 0
    %98 = vmatpush1.bf16.msra.mxu0 0
    %99 = vmatprep.subr.bf16.mxu0 0
    %100 = vmatpush1.bf16.msra.mxu0 0
    %101 = vmatprep.mubr.bf16.mxu0 0
    %102 = vmatmul.mubr.bf16.gmra.mrb[0].mxu0 %v67
    %v103 = vpop.f32.mrb[0].mxu0
    %v104 = vadd.f32 %v51, %v103
    %v105 = vpop.f32.mrb[0].mxu0
    %v106 = vpop.f32.mrb[0].mxu0
    %v107 = vpop.f32.mrb[0].mxu0
    %108 = vdwg.mxu0
    %v109 = vmax.f32 %v104, 0.0
    %v110 = vpack.c.bf16 %v109, %v109
    %v111 = vld [vmem:[%s3] sm:$0xf]
    %v112 = vld [vmem:[%s3 + $0x4] sm:$0xf]
    %v113 = vld [vmem:[%s3 + $0x8] sm:$0xf]
    %v114 = vld [vmem:[%s3 + $0xc] sm:$0xf]
    %v115 = vld [vmem:[%s3 + $0x10] sm:$0xf]
    %v116 = vld [vmem:[%s3 + $0x14] sm:$0xf]
    %v117 = vld [vmem:[%s3 + $0x18] sm:$0xf]
    %v118 = vld [vmem:[%s3 + $0x1c] sm:$0xf]
    %v119 = vld [vmem:[%s3 + $0x20] sm:$0xf]
    %v120 = vld [vmem:[%s3 + $0x24] sm:$0xf]
    %v121 = vld [vmem:[%s3 + $0x28] sm:$0xf]
    %v122 = vld [vmem:[%s3 + $0x2c] sm:$0xf]
    %v123 = vld [vmem:[%s3 + $0x30] sm:$0xf]
    %v124 = vld [vmem:[%s3 + $0x34] sm:$0xf]
    %v125 = vld [vmem:[%s3 + $0x38] sm:$0xf]
    %v126 = vld [vmem:[%s3 + $0x3c] sm:$0xf]
    %v127 = vld [vmem:[%s4] sm:$0x1]
    %v129 = vlaneseq
    %v130 = vshrl.u32 %v129, 7
    %v131 = vsub.s32 0, %v130
    %v132 = vrot.slane %v127, %v131
    %v150 = vunpack.c.l.b16 %v111
    %v151 = vunpack.c.l.b16 %v112
    %v152 = vunpack.c.l.b16 %v113
    %v153 = vunpack.c.l.b16 %v114
    %v154 = vunpack.c.l.b16 %v115
    %v155 = vunpack.c.l.b16 %v116
    %v156 = vunpack.c.l.b16 %v117
    %v157 = vunpack.c.l.b16 %v118
    %v158 = vunpack.c.l.b16 %v119
    %v159 = vunpack.c.l.b16 %v120
    %v160 = vunpack.c.l.b16 %v121
    %v161 = vunpack.c.l.b16 %v122
    %v162 = vunpack.c.l.b16 %v123
    %v163 = vunpack.c.l.b16 %v124
    %v164 = vunpack.c.l.b16 %v125
    %v165 = vunpack.c.l.b16 %v126
    %v166 = vpack.c.b16 %v151, %v150
    %v167 = vpack.c.b16 %v153, %v152
    %v168 = vpack.c.b16 %v155, %v154
    %v169 = vpack.c.b16 %v157, %v156
    %v170 = vpack.c.b16 %v159, %v158
    %v171 = vpack.c.b16 %v161, %v160
    %v172 = vpack.c.b16 %v163, %v162
    %v173 = vpack.c.b16 %v165, %v164
    %182 = vmatprep.subr.bf16.mxu0 0
    %183 = vmatpush1.bf16.msra.mxu0 %v166
    %184 = vmatprep.subr.bf16.mxu0 0
    %185 = vmatpush1.bf16.msra.mxu0 %v167
    %186 = vmatprep.subr.bf16.mxu0 0
    %187 = vmatpush1.bf16.msra.mxu0 %v168
    %188 = vmatprep.subr.bf16.mxu0 0
    %189 = vmatpush1.bf16.msra.mxu0 %v169
    %190 = vmatprep.subr.bf16.mxu0 0
    %191 = vmatpush1.bf16.msra.mxu0 %v170
    %192 = vmatprep.subr.bf16.mxu0 0
    %193 = vmatpush1.bf16.msra.mxu0 %v171
    %194 = vmatprep.subr.bf16.mxu0 0
    %195 = vmatpush1.bf16.msra.mxu0 %v172
    %196 = vmatprep.subr.bf16.mxu0 0
    %197 = vmatpush1.bf16.msra.mxu0 %v173
    %198 = vmatprep.subr.bf16.mxu0 0
    %199 = vmatpush1.bf16.msra.mxu0 0
    %200 = vmatprep.subr.bf16.mxu0 0
    %201 = vmatpush1.bf16.msra.mxu0 0
    %202 = vmatprep.subr.bf16.mxu0 0
    %203 = vmatpush1.bf16.msra.mxu0 0
    %204 = vmatprep.subr.bf16.mxu0 0
    %205 = vmatpush1.bf16.msra.mxu0 0
    %206 = vmatprep.subr.bf16.mxu0 0
    %207 = vmatpush1.bf16.msra.mxu0 0
    %208 = vmatprep.subr.bf16.mxu0 0
    %209 = vmatpush1.bf16.msra.mxu0 0
    %210 = vmatprep.subr.bf16.mxu0 0
    %211 = vmatpush1.bf16.msra.mxu0 0
    %212 = vmatprep.subr.bf16.mxu0 0
    %213 = vmatpush1.bf16.msra.mxu0 0
    %214 = vmatprep.mubr.bf16.mxu0 0
    %215 = vmatmul.mubr.bf16.gmra.mrb[0].mxu0 %v110
    %v216 = vpop.f32.mrb[0].mxu0
    %v217 = vadd.f32 %v132, %v216
    %v218 = vpop.f32.mrb[0].mxu0
    %v219 = vpop.f32.mrb[0].mxu0
    %v220 = vpop.f32.mrb[0].mxu0
    %221 = vdwg.mxu0
    %v222 = vmax.f32 %v217, 0.0
    %v223 = vpack.c.bf16 %v222, %v222
    %v224 = vld [vmem:[%s5] sm:$0xf]
    %v225 = vld [vmem:[%s5 + $0x4] sm:$0xf]
    %v226 = vld [vmem:[%s5 + $0x8] sm:$0xf]
    %v227 = vld [vmem:[%s5 + $0xc] sm:$0xf]
    %v228 = vld [vmem:[%s5 + $0x10] sm:$0xf]
    %v229 = vld [vmem:[%s5 + $0x14] sm:$0xf]
    %v230 = vld [vmem:[%s5 + $0x18] sm:$0xf]
    %v231 = vld [vmem:[%s5 + $0x1c] sm:$0xf]
    %v232 = vld [vmem:[%s5 + $0x20] sm:$0xf]
    %v233 = vld [vmem:[%s5 + $0x24] sm:$0xf]
    %v234 = vld [vmem:[%s5 + $0x28] sm:$0xf]
    %v235 = vld [vmem:[%s5 + $0x2c] sm:$0xf]
    %v236 = vld [vmem:[%s5 + $0x30] sm:$0xf]
    %v237 = vld [vmem:[%s5 + $0x34] sm:$0xf]
    %v238 = vld [vmem:[%s5 + $0x38] sm:$0xf]
    %v239 = vld [vmem:[%s5 + $0x3c] sm:$0xf]
    %v240 = vld [vmem:[%s6] sm:$0x1]
    %v242 = vlaneseq
    %v243 = vshrl.u32 %v242, 7
    %v244 = vsub.s32 0, %v243
    %v245 = vrot.slane %v240, %v244
    %v263 = vunpack.c.l.b16 %v224
    %v264 = vunpack.c.l.b16 %v225
    %v265 = vunpack.c.l.b16 %v226
    %v266 = vunpack.c.l.b16 %v227
    %v267 = vunpack.c.l.b16 %v228
    %v268 = vunpack.c.l.b16 %v229
    %v269 = vunpack.c.l.b16 %v230
    %v270 = vunpack.c.l.b16 %v231
    %v271 = vunpack.c.l.b16 %v232
    %v272 = vunpack.c.l.b16 %v233
    %v273 = vunpack.c.l.b16 %v234
    %v274 = vunpack.c.l.b16 %v235
    %v275 = vunpack.c.l.b16 %v236
    %v276 = vunpack.c.l.b16 %v237
    %v277 = vunpack.c.l.b16 %v238
    %v278 = vunpack.c.l.b16 %v239
    %v279 = vpack.c.b16 %v264, %v263
    %v280 = vpack.c.b16 %v266, %v265
    %v281 = vpack.c.b16 %v268, %v267
    %v282 = vpack.c.b16 %v270, %v269
    %v283 = vpack.c.b16 %v272, %v271
    %v284 = vpack.c.b16 %v274, %v273
    %v285 = vpack.c.b16 %v276, %v275
    %v286 = vpack.c.b16 %v278, %v277
    %295 = vmatprep.subr.bf16.mxu0 0
    %296 = vmatpush1.bf16.msra.mxu0 %v279
    %297 = vmatprep.subr.bf16.mxu0 0
    %298 = vmatpush1.bf16.msra.mxu0 %v280
    %299 = vmatprep.subr.bf16.mxu0 0
    %300 = vmatpush1.bf16.msra.mxu0 %v281
    %301 = vmatprep.subr.bf16.mxu0 0
    %302 = vmatpush1.bf16.msra.mxu0 %v282
    %303 = vmatprep.subr.bf16.mxu0 0
    %304 = vmatpush1.bf16.msra.mxu0 %v283
    %305 = vmatprep.subr.bf16.mxu0 0
    %306 = vmatpush1.bf16.msra.mxu0 %v284
    %307 = vmatprep.subr.bf16.mxu0 0
    %308 = vmatpush1.bf16.msra.mxu0 %v285
    %309 = vmatprep.subr.bf16.mxu0 0
    %310 = vmatpush1.bf16.msra.mxu0 %v286
    %311 = vmatprep.subr.bf16.mxu0 0
    %312 = vmatpush1.bf16.msra.mxu0 0
    %313 = vmatprep.subr.bf16.mxu0 0
    %314 = vmatpush1.bf16.msra.mxu0 0
    %315 = vmatprep.subr.bf16.mxu0 0
    %316 = vmatpush1.bf16.msra.mxu0 0
    %317 = vmatprep.subr.bf16.mxu0 0
    %318 = vmatpush1.bf16.msra.mxu0 0
    %319 = vmatprep.subr.bf16.mxu0 0
    %320 = vmatpush1.bf16.msra.mxu0 0
    %321 = vmatprep.subr.bf16.mxu0 0
    %322 = vmatpush1.bf16.msra.mxu0 0
    %323 = vmatprep.subr.bf16.mxu0 0
    %324 = vmatpush1.bf16.msra.mxu0 0
    %325 = vmatprep.subr.bf16.mxu0 0
    %326 = vmatpush1.bf16.msra.mxu0 0
    %327 = vmatprep.mubr.bf16.mxu0 0
    %328 = vmatmul.mubr.bf16.gmra.mrb[0].mxu0 %v223
    %v329 = vpop.f32.mrb[0].mxu0
    %v330 = vadd.f32 %v245, %v329
    %v331 = vpop.f32.mrb[0].mxu0
    %v332 = vpop.f32.mrb[0].mxu0
    %v333 = vpop.f32.mrb[0].mxu0
    %334 = vdwg.mxu0
    %v335 = vmax.f32 %v330, 0.0
    %vm336 = vcmask 130048
    %337 = vst.msk [vmem:[#allocation5] sm:$0xff] %vm336, %v335
    // Predicated region
    $region34: #{tpu_custom_call.1} parent=1 // pred_check
      _
    $region35: #{tpu_custom_call.1} parent=1 // pred_check_branch
      %339 = sbr.rel (0) target = $region37
    $region36: #{tpu_custom_call.1} parent=1 // pred_region
      %s341 = ssub.s32 128, 128
      %342 = vsyncadd [#allocation4], %s341
      %s344 = sshll.u32 [#allocation5], 4
      %s345 = int_to_ptr.vmem [resolvable:$true] %s344
      %347 = dma.vmem_to_hbm [thread:$0]  %s345, 128, %s7, [#allocation4]
    $region37: #{tpu_custom_call.1} parent=1 // pred_fallthru
      _
    // Predicated region
    $region38: #{tpu_custom_call.1} parent=1 // pred_check
      _
    $region39: #{tpu_custom_call.1} parent=1 // pred_check_branch
      %349 = sbr.rel (0) target = $region41
    $region40: #{tpu_custom_call.1} parent=1 // pred_region
      %350 = dma.done [#allocation4], 128
    $region41: #{tpu_custom_call.1} parent=1 // pred_fallthru
      _
    %351 = vsyncpa [#allocation3], 1
    %352 = vsyncpa [#allocation4], 1

</llo_original>
